<compile_context>
chip_gen: v5e
topology: v5e:2x2
jax: 0.10.0
libtpu: 0.0.40
codegen_flags: <defaults>
</compile_context>

<pallas_src>
import jax
import jax.numpy as jnp
from jax.experimental import pallas as pl
from jax.experimental.pallas import tpu as pltpu

DIVERSITY_LAMBDA = 0.25
RATING_LAMBDA = 0.2
LHS_ROWS = 16  # native bf16 sublane tile; rows 0..3 live, rest zero padding


def _group_stats_kernel(lhs_ref, ids_col_ref, ids_row_ref, out_ref):
    # Zero the resident output block at the start of the contraction loop.
    @pl.when(pl.program_id(1) == 0)
    def _():
        out_ref[...] = jnp.zeros_like(out_ref)

    # eq[i, j] = (ids[i] == ids[j]) for this (row-block, col-block) tile.
    # bf16 operands feed the MXU natively; values are exactly {0, 1} so the
    # bf16-exact hi/mid/lo split of pred keeps ~f32-accurate group sums.
    eq = (ids_col_ref[...] == ids_row_ref[...]).astype(jnp.bfloat16)   # (T, T)
    out_ref[...] += jnp.dot(lhs_ref[...], eq,
                            preferred_element_type=jnp.float32)        # (16, T)


def _epilogue_kernel(acc_ref, pred_ref, target_ref, valid_ref, out_ref):
    acc = acc_ref[...]                         # (16, Np) f32
    valid = valid_ref[...]                     # (1, Np): 1.0 real / 0.0 pad
    counts = acc[0:1, :]                       # group size seen by element j
    group_sum = acc[1:2, :] + acc[2:3, :] + acc[3:4, :]   # hi + mid + lo

    counts_safe = counts + (1.0 - valid)       # avoid 0/0 on padded lanes
    group_mean = group_sum / counts_safe       # mean pred of this item's group
    w = valid / counts_safe                    # each unique group sums to 1

    u = jnp.sum(w)                             # number of unique items
    mean = jnp.sum(w * group_mean) / u
    centered = group_mean - mean
    # Unbiased variance (ddof=1), matching torch.std default.
    # TODO(synk): u == 1 (single unique item) divides by zero; torch.std also
    # returns nan for a length-1 tensor, so this path is intentionally unguarded.
    var = jnp.sum(w * centered * centered) / (u - 1.0)
    diversity_loss = jnp.exp(-jnp.sqrt(var))

    pred = pred_ref[...]
    target = target_ref[...]
    diff = (pred - target) * valid
    n_real = jnp.sum(valid)
    base_loss = jnp.sum(diff * diff) / n_real

    p_max = jnp.max(jnp.where(valid > 0.0, pred, -jnp.inf))
    p_min = jnp.min(jnp.where(valid > 0.0, pred, jnp.inf))
    rating_loss = jnp.exp(-(p_max - p_min))

    out_ref[0, 0] = (base_loss
                     + DIVERSITY_LAMBDA * diversity_loss
                     + RATING_LAMBDA * rating_loss)


def _round_up(x, m):
    return ((x + m - 1) // m) * m


def diversity_aware_loss(pred, target, item_ids, *, tile=512):
    """pred, target: (N,) float32; item_ids: (N,) int32 -> scalar float32."""
    n = pred.shape[0]
    # Tile multiple of 256 (v6e/v7x MXU weight tile), clamped to problem size;
    # pad N to a multiple of the tile so no ragged block is ever dropped.
    t = _round_up(max(256, min(int(tile), _round_up(n, 256))), 256)
    n_pad = _round_up(n, t)
    pad = n_pad - n
    num_blocks = n_pad // t

    pred_p = jnp.pad(pred.astype(jnp.float32), (0, pad))
    target_p = jnp.pad(target.astype(jnp.float32), (0, pad))
    valid = (jnp.arange(n_pad) < n).astype(jnp.float32)
    ids_p = jnp.pad(item_ids.astype(jnp.int32), (0, pad), constant_values=-1)

    # Three-term bf16-exact split of pred: hi + mid + lo reconstructs pred to
    # ~f32 accuracy, so the bf16 MXU matmul loses no precision in group sums.
    p_hi = pred_p.astype(jnp.bfloat16)
    r1 = pred_p - p_hi.astype(jnp.float32)
    p_mid = r1.astype(jnp.bfloat16)
    r2 = r1 - p_mid.astype(jnp.float32)
    p_lo = r2.astype(jnp.bfloat16)

    # (16, Np) bf16 MXU LHS: row 0 = validity mask, rows 1..3 = pred hi/mid/lo,
    # rows 4..15 = zeros (keeps the bf16 sublane tile fully native).
    lhs = jnp.zeros((LHS_ROWS, n_pad), jnp.bfloat16)
    lhs = (lhs.at[0].set(valid.astype(jnp.bfloat16))
              .at[1].set(p_hi).at[2].set(p_mid).at[3].set(p_lo))

    ids_row = ids_p.reshape(1, n_pad)
    ids_col = ids_p.reshape(n_pad, 1)
    pred2d = pred_p.reshape(1, n_pad)
    target2d = target_p.reshape(1, n_pad)
    valid2d = valid.reshape(1, n_pad)

    # Live VMEM is O(t*t) bf16 plus small blocks, independent of N; keep the
    # scoped limit well under v7x's 64 MiB physical VMEM.
    vmem_limit = int(min(48 * 2**20, max(16 * 2**20, 8 * t * t)))

    # --- Pass 1: lane-dense (16, Np) group counts / group pred sums ----------
    acc = pl.pallas_call(
        _group_stats_kernel,
        out_shape=jax.ShapeDtypeStruct((LHS_ROWS, n_pad), jnp.float32),
        grid_spec=pltpu.PrefetchScalarGridSpec(
            num_scalar_prefetch=0,
            grid=(num_blocks, num_blocks),      # (output cols j, contraction k)
            in_specs=[
                pl.BlockSpec((LHS_ROWS, t), lambda j, k: (0, k)),  # lhs slice
                pl.BlockSpec((t, 1), lambda j, k: (k, 0)),         # ids column
                pl.BlockSpec((1, t), lambda j, k: (0, j)),         # ids row
            ],
            out_specs=pl.BlockSpec((LHS_ROWS, t), lambda j, k: (0, j)),
        ),
        compiler_params=pltpu.CompilerParams(
            dimension_semantics=("parallel", "arbitrary"),
            vmem_limit_bytes=vmem_limit,
        ),
    )(lhs, ids_col, ids_row)

    # --- Pass 2: O(N) epilogue, scalar loss through SMEM ---------------------
    out = pl.pallas_call(
        _epilogue_kernel,
        out_shape=jax.ShapeDtypeStruct((1, 1), jnp.float32),
        in_specs=[pl.BlockSpec(memory_space=pltpu.MemorySpace.VMEM)] * 4,
        out_specs=pl.BlockSpec(memory_space=pltpu.MemorySpace.SMEM),
        compiler_params=pltpu.CompilerParams(
            vmem_limit_bytes=int(min(48 * 2**20,
                                     max(16 * 2**20, 128 * n_pad))),
        ),
    )(acc, pred2d, target2d, valid2d)
    return out[0, 0]


def _reference(pred, target, item_ids):
    base = jnp.mean((pred - target) ** 2)
    uniq, inv, cnt = jnp.unique(item_ids, return_inverse=True, return_counts=True)
    item_preds = (jnp.zeros(uniq.shape[0], jnp.float32).at[inv].add(pred)
                  / cnt.astype(jnp.float32))
    pred_std = jnp.std(item_preds, ddof=1)
    diversity = jnp.exp(-pred_std)
    rating_range = jnp.max(pred) - jnp.min(pred)
    rating = jnp.exp(-rating_range)
    return base + DIVERSITY_LAMBDA * diversity + RATING_LAMBDA * rating


if __name__ == "__main__":
    key = jax.random.PRNGKey(0)
    k1, k2, k3 = jax.random.split(key, 3)

    N = 64  # batch of ratings
    pred = jax.random.uniform(k1, (N,), jnp.float32, minval=0.5, maxval=5.0)
    target = jax.random.uniform(k2, (N,), jnp.float32, minval=0.5, maxval=5.0)
    item_ids = jax.random.randint(k3, (N,), 0, 10, dtype=jnp.int32)  # duplicates guaranteed

    loss = diversity_aware_loss(pred, target, item_ids)
    jax.block_until_ready(loss)

    ref = _reference(pred, target, item_ids)
    assert jnp.allclose(loss, ref, rtol=1e-5, atol=1e-5), (loss, ref)

    print("KERNEL_OK")
</pallas_src>

<mosaic_0001>
module attributes {stable_mosaic.version = 11 : i64} {
  func.func @_group_stats_kernel(%arg0: i32, %arg1: i32, %arg2: memref<16x256xbf16, #tpu.memory_space<vmem>>, %arg3: memref<256x1xi32, #tpu.memory_space<vmem>>, %arg4: memref<1x256xi32, #tpu.memory_space<vmem>>, %arg5: memref<16x256xf32, #tpu.memory_space<vmem>>) attributes {dimension_semantics = [#tpu.dimension_semantics<parallel>, #tpu.dimension_semantics<arbitrary>], iteration_bounds = array<i64: 1, 1>, scalar_prefetch = 0 : i64, scratch_operands = 0 : i64, tpu.core_type = #tpu.core_type<tc>, window_params = [{transform_indices = @transform_0, window_bounds = array<i64: 16, 256>}, {transform_indices = @transform_1, window_bounds = array<i64: 256, 1>}, {transform_indices = @transform_2, window_bounds = array<i64: 1, 256>}, {transform_indices = @transform_3, window_bounds = array<i64: 16, 256>}]} {
    %c0_i32 = arith.constant 0 : i32
    %0 = arith.cmpi eq, %arg1, %c0_i32 : i32
    %1 = arith.extui %0 : i1 to i32
    %c0_i32_0 = arith.constant 0 : i32
    %2 = arith.cmpi ne, %1, %c0_i32_0 : i32
    scf.if %2 {
      %cst_10 = arith.constant 0.000000e+00 : f32
      %16 = vector.broadcast %cst_10 : f32 to vector<16x256xf32>
      %c0_11 = arith.constant 0 : index
      %c0_12 = arith.constant 0 : index
      %17 = vector.load %arg5[%c0_11, %c0_12] : memref<16x256xf32, #tpu.memory_space<vmem>>, vector<16x256xf32>
      tpu.vector_store %arg5[%c0_11, %c0_12], %16 {strides = array<i32>} : memref<16x256xf32, #tpu.memory_space<vmem>>, vector<16x256xf32>,
    } else {
    }
    %c0 = arith.constant 0 : index
    %c0_1 = arith.constant 0 : index
    %3 = vector.load %arg3[%c0, %c0_1] : memref<256x1xi32, #tpu.memory_space<vmem>>, vector<256x1xi32>
    %c0_2 = arith.constant 0 : index
    %c0_3 = arith.constant 0 : index
    %4 = vector.load %arg4[%c0_2, %c0_3] : memref<1x256xi32, #tpu.memory_space<vmem>>, vector<1x256xi32>
    %5 = vector.broadcast %3 : vector<256x1xi32> to vector<256x256xi32>
    %6 = vector.broadcast %4 : vector<1x256xi32> to vector<256x256xi32>
    %7 = arith.cmpi eq, %5, %6 : vector<256x256xi32>
    %8 = arith.extui %7 : vector<256x256xi1> to vector<256x256xi32>
    %9 = arith.sitofp %8 : vector<256x256xi32> to vector<256x256xf32>
    %10 = arith.truncf %9 : vector<256x256xf32> to vector<256x256xbf16>
    %c0_4 = arith.constant 0 : index
    %c0_5 = arith.constant 0 : index
    %11 = vector.load %arg5[%c0_4, %c0_5] : memref<16x256xf32, #tpu.memory_space<vmem>>, vector<16x256xf32>
    %c0_6 = arith.constant 0 : index
    %c0_7 = arith.constant 0 : index
    %12 = vector.load %arg2[%c0_6, %c0_7] : memref<16x256xbf16, #tpu.memory_space<vmem>>, vector<16x256xbf16>
    %cst = arith.constant dense<0.000000e+00> : vector<16x256xf32>
    %13 = tpu.matmul %12, %10, %cst {dimension_numbers = #tpu.dot_dimension_numbers<[1], [0], [0], [1], [0, 0, 1, 1], [], []>} : vector<16x256xbf16>, vector<256x256xbf16>, vector<16x256xf32> -> vector<16x256xf32>
    %14 = arith.addf %11, %13 : vector<16x256xf32>
    %c0_8 = arith.constant 0 : index
    %c0_9 = arith.constant 0 : index
    %15 = vector.load %arg5[%c0_8, %c0_9] : memref<16x256xf32, #tpu.memory_space<vmem>>, vector<16x256xf32>
    tpu.vector_store %arg5[%c0_8, %c0_9], %14 {strides = array<i32>} : memref<16x256xf32, #tpu.memory_space<vmem>>, vector<16x256xf32>,
    return
  }
  func.func @transform_0(%arg0: i32, %arg1: i32) -> (i32, i32) {
    %c0_i32 = arith.constant 0 : i32
    %c0_i32_0 = arith.constant 0 : i32
    return %c0_i32, %arg1 : i32, i32
  }
  func.func @transform_1(%arg0: i32, %arg1: i32) -> (i32, i32) {
    %c0_i32 = arith.constant 0 : i32
    %c0_i32_0 = arith.constant 0 : i32
    return %arg1, %c0_i32 : i32, i32
  }
  func.func @transform_2(%arg0: i32, %arg1: i32) -> (i32, i32) {
    %c0_i32 = arith.constant 0 : i32
    %c0_i32_0 = arith.constant 0 : i32
    return %c0_i32, %arg0 : i32, i32
  }
  func.func @transform_3(%arg0: i32, %arg1: i32) -> (i32, i32) {
    %c0_i32 = arith.constant 0 : i32
    %c0_i32_0 = arith.constant 0 : i32
    return %c0_i32, %arg0 : i32, i32
  }
}

</mosaic_0001>

<llo_original>
// kernel: tpu_custom_call.1
$region0: #{tpu_custom_call.1}
  #allocation0 [shape = 'u32[]', space=smem, size = 0x4, offset = 0x4, fixed_abs, tag = 'smem constant byte address 0x4 - core index']
  #allocation1 [shape = 'u32[72,128]{1,0:T(1,128)}', space=vmem, size = 0x9000, scoped, tag = 'internal scratch']
  %s0 = inlined_call_operand.vmem [shape: bf16[16,256], index: 0, kind: input, shape index: {}]
  %s1 = inlined_call_operand.vmem [shape: s32[256,1], index: 1, kind: input, shape index: {}]
  %s2 = inlined_call_operand.vmem [shape: s32[1,256], index: 2, kind: input, shape index: {}]
  %s3 = inlined_call_operand.hbm [shape: f32[16,256], index: 3, kind: output, shape index: {}]
  %s4 = sld [smem:[#allocation0]]
  $region26: #{tpu_custom_call.1} parent=0
    _
  %s6 = ssub.s32 1, %s4
  %s7 = scalar_select 0, %s6, %s4
  $region1: #{tpu_custom_call.1} parent=0
    #allocation2 [shape = 'u8[16384]{0}', space=vmem, size = 0x4000, scoped, tag = 'output window, operand 0, single buffered']
    #allocation3 [shape = 's32[1]{0}', space=sflag, size = 0x4, scoped, tag = 'scoped memory for tpu_custom_call.1']
    %8 = vsyncpa [#allocation3], 0
    // Predicated region
    $region2: #{tpu_custom_call.1} parent=1 // pred_check
      _
    $region3: #{tpu_custom_call.1} parent=1 // pred_check_branch
      %10 = sbr.rel (0) target = $region5
    $region4: #{tpu_custom_call.1} parent=1 // pred_region
      _
    $region5: #{tpu_custom_call.1} parent=1 // pred_fallthru
      _
    // Predicated region
    $region6: #{tpu_custom_call.1} parent=1 // pred_check
      _
    $region7: #{tpu_custom_call.1} parent=1 // pred_check_branch
      %12 = sbr.rel (0) target = $region9
    $region8: #{tpu_custom_call.1} parent=1 // pred_region
      _
    $region9: #{tpu_custom_call.1} parent=1 // pred_fallthru
      _
    // Predicated region
    $region10: #{tpu_custom_call.1} parent=1 // pred_check
      _
    $region11: #{tpu_custom_call.1} parent=1 // pred_check_branch
      %14 = sbr.rel (0) target = $region13
    $region12: #{tpu_custom_call.1} parent=1 // pred_region
      _
    $region13: #{tpu_custom_call.1} parent=1 // pred_fallthru
      _
    %p15 = scmp.eq.s32.totalorder 0, 0
    // Predicated region
    $region14: #{tpu_custom_call.1} parent=1 // pred_check
      %p16 = pneg %p15
    $region15: #{tpu_custom_call.1} parent=1 // pred_check_branch
      %18 = sbr.rel (%p16) target = $region17
    $region16: #{tpu_custom_call.1} parent=1 // pred_region
      %19 = vst [vmem:[#allocation2] sm:$0xff] 0.0
      %20 = vst [vmem:[#allocation2 + $0x8] sm:$0xff] 0.0
      %21 = vst [vmem:[#allocation2 + $0x10] sm:$0xff] 0.0
      %22 = vst [vmem:[#allocation2 + $0x18] sm:$0xff] 0.0
    $region17: #{tpu_custom_call.1} parent=1 // pred_fallthru
      _
    %v23 = vld [vmem:[%s1] sm:$0xff]
    %v24 = vld [vmem:[%s1 + $0x8] sm:$0xff]
    %v25 = vld [vmem:[%s1 + $0x10] sm:$0xff]
    %v26 = vld [vmem:[%s1 + $0x18] sm:$0xff]
    %v27 = vld [vmem:[%s1 + $0x20] sm:$0xff]
    %v28 = vld [vmem:[%s1 + $0x28] sm:$0xff]
    %v29 = vld [vmem:[%s1 + $0x30] sm:$0xff]
    %v30 = vld [vmem:[%s1 + $0x38] sm:$0xff]
    %v31 = vld [vmem:[%s1 + $0x40] sm:$0xff]
    %v32 = vld [vmem:[%s1 + $0x48] sm:$0xff]
    %v33 = vld [vmem:[%s1 + $0x50] sm:$0xff]
    %v34 = vld [vmem:[%s1 + $0x58] sm:$0xff]
    %v35 = vld [vmem:[%s1 + $0x60] sm:$0xff]
    %v36 = vld [vmem:[%s1 + $0x68] sm:$0xff]
    %v37 = vld [vmem:[%s1 + $0x70] sm:$0xff]
    %v38 = vld [vmem:[%s1 + $0x78] sm:$0xff]
    %v39 = vld [vmem:[%s1 + $0x80] sm:$0xff]
    %v40 = vld [vmem:[%s1 + $0x88] sm:$0xff]
    %v41 = vld [vmem:[%s1 + $0x90] sm:$0xff]
    %v42 = vld [vmem:[%s1 + $0x98] sm:$0xff]
    %v43 = vld [vmem:[%s1 + $0xa0] sm:$0xff]
    %v44 = vld [vmem:[%s1 + $0xa8] sm:$0xff]
    %v45 = vld [vmem:[%s1 + $0xb0] sm:$0xff]
    %v46 = vld [vmem:[%s1 + $0xb8] sm:$0xff]
    %v47 = vld [vmem:[%s1 + $0xc0] sm:$0xff]
    %v48 = vld [vmem:[%s1 + $0xc8] sm:$0xff]
    %v49 = vld [vmem:[%s1 + $0xd0] sm:$0xff]
    %v50 = vld [vmem:[%s1 + $0xd8] sm:$0xff]
    %v51 = vld [vmem:[%s1 + $0xe0] sm:$0xff]
    %v52 = vld [vmem:[%s1 + $0xe8] sm:$0xff]
    %v53 = vld [vmem:[%s1 + $0xf0] sm:$0xff]
    %v54 = vld [vmem:[%s1 + $0xf8] sm:$0xff]
    %v55 = vld [vmem:[%s2] sm:$0x3]
    %56 = vset.pattern.permute.xlu0 0
    %57 = vperm.xlu0 %56, %v23
    %v58 = vpop.permute.xlu0 %57
    %59 = vset.pattern.permute.xlu0 0
    %60 = vperm.xlu0 %59, %v24
    %v61 = vpop.permute.xlu0 %60
    %62 = vset.pattern.permute.xlu0 0
    %63 = vperm.xlu0 %62, %v25
    %v64 = vpop.permute.xlu0 %63
    %65 = vset.pattern.permute.xlu0 0
    %66 = vperm.xlu0 %65, %v26
    %v67 = vpop.permute.xlu0 %66
    %68 = vset.pattern.permute.xlu0 0
    %69 = vperm.xlu0 %68, %v27
    %v70 = vpop.permute.xlu0 %69
    %71 = vset.pattern.permute.xlu0 0
    %72 = vperm.xlu0 %71, %v28
    %v73 = vpop.permute.xlu0 %72
    %74 = vset.pattern.permute.xlu0 0
    %75 = vperm.xlu0 %74, %v29
    %v76 = vpop.permute.xlu0 %75
    %77 = vset.pattern.permute.xlu0 0
    %78 = vperm.xlu0 %77, %v30
    %v79 = vpop.permute.xlu0 %78
    %80 = vset.pattern.permute.xlu0 0
    %81 = vperm.xlu0 %80, %v31
    %v82 = vpop.permute.xlu0 %81
    %83 = vset.pattern.permute.xlu0 0
    %84 = vperm.xlu0 %83, %v32
    %v85 = vpop.permute.xlu0 %84
    %86 = vset.pattern.permute.xlu0 0
    %87 = vperm.xlu0 %86, %v33
    %v88 = vpop.permute.xlu0 %87
    %89 = vset.pattern.permute.xlu0 0
    %90 = vperm.xlu0 %89, %v34
    %v91 = vpop.permute.xlu0 %90
    %92 = vset.pattern.permute.xlu0 0
    %93 = vperm.xlu0 %92, %v35
    %v94 = vpop.permute.xlu0 %93
    %95 = vset.pattern.permute.xlu0 0
    %96 = vperm.xlu0 %95, %v36
    %v97 = vpop.permute.xlu0 %96
    %98 = vset.pattern.permute.xlu0 0
    %99 = vperm.xlu0 %98, %v37
    %v100 = vpop.permute.xlu0 %99
    %101 = vset.pattern.permute.xlu0 0
    %102 = vperm.xlu0 %101, %v38
    %v103 = vpop.permute.xlu0 %102
    %104 = vset.pattern.permute.xlu0 0
    %105 = vperm.xlu0 %104, %v39
    %v106 = vpop.permute.xlu0 %105
    %107 = vset.pattern.permute.xlu0 0
    %108 = vperm.xlu0 %107, %v40
    %v109 = vpop.permute.xlu0 %108
    %110 = vset.pattern.permute.xlu0 0
    %111 = vperm.xlu0 %110, %v41
    %v112 = vpop.permute.xlu0 %111
    %113 = vset.pattern.permute.xlu0 0
    %114 = vperm.xlu0 %113, %v42
    %v115 = vpop.permute.xlu0 %114
    %116 = vset.pattern.permute.xlu0 0
    %117 = vperm.xlu0 %116, %v43
    %v118 = vpop.permute.xlu0 %117
    %119 = vset.pattern.permute.xlu0 0
    %120 = vperm.xlu0 %119, %v44
    %v121 = vpop.permute.xlu0 %120
    %122 = vset.pattern.permute.xlu0 0
    %123 = vperm.xlu0 %122, %v45
    %v124 = vpop.permute.xlu0 %123
    %125 = vset.pattern.permute.xlu0 0
    %126 = vperm.xlu0 %125, %v46
    %v127 = vpop.permute.xlu0 %126
    %128 = vset.pattern.permute.xlu0 0
    %129 = vperm.xlu0 %128, %v47
    %v130 = vpop.permute.xlu0 %129
    %131 = vset.pattern.permute.xlu0 0
    %132 = vperm.xlu0 %131, %v48
    %v133 = vpop.permute.xlu0 %132
    %134 = vset.pattern.permute.xlu0 0
    %135 = vperm.xlu0 %134, %v49
    %v136 = vpop.permute.xlu0 %135
    %137 = vset.pattern.permute.xlu0 0
    %138 = vperm.xlu0 %137, %v50
    %v139 = vpop.permute.xlu0 %138
    %140 = vset.pattern.permute.xlu0 0
    %141 = vperm.xlu0 %140, %v51
    %v142 = vpop.permute.xlu0 %141
    %143 = vset.pattern.permute.xlu0 0
    %144 = vperm.xlu0 %143, %v52
    %v145 = vpop.permute.xlu0 %144
    %146 = vset.pattern.permute.xlu0 0
    %147 = vperm.xlu0 %146, %v53
    %v148 = vpop.permute.xlu0 %147
    %149 = vset.pattern.permute.xlu0 0
    %150 = vperm.xlu0 %149, %v54
    %v151 = vpop.permute.xlu0 %150
    %v152 = vperm.slane %v55, 0
    %v153 = vperm.slane %v55, 1
    %vm154 = vcmp.eq.s32.totalorder %v58, %v152
    %vm155 = vcmp.eq.s32.totalorder %v58, %v153
    %vm156 = vcmp.eq.s32.totalorder %v61, %v152
    %vm157 = vcmp.eq.s32.totalorder %v61, %v153
    %vm158 = vcmp.eq.s32.totalorder %v64, %v152
    %vm159 = vcmp.eq.s32.totalorder %v64, %v153
    %vm160 = vcmp.eq.s32.totalorder %v67, %v152
    %vm161 = vcmp.eq.s32.totalorder %v67, %v153
    %vm162 = vcmp.eq.s32.totalorder %v70, %v152
    %vm163 = vcmp.eq.s32.totalorder %v70, %v153
    %vm164 = vcmp.eq.s32.totalorder %v73, %v152
    %vm165 = vcmp.eq.s32.totalorder %v73, %v153
    %vm166 = vcmp.eq.s32.totalorder %v76, %v152
    %vm167 = vcmp.eq.s32.totalorder %v76, %v153
    %vm168 = vcmp.eq.s32.totalorder %v79, %v152
    %vm169 = vcmp.eq.s32.totalorder %v79, %v153
    %vm170 = vcmp.eq.s32.totalorder %v82, %v152
    %vm171 = vcmp.eq.s32.totalorder %v82, %v153
    %vm172 = vcmp.eq.s32.totalorder %v85, %v152
    %vm173 = vcmp.eq.s32.totalorder %v85, %v153
    %vm174 = vcmp.eq.s32.totalorder %v88, %v152
    %vm175 = vcmp.eq.s32.totalorder %v88, %v153
    %vm176 = vcmp.eq.s32.totalorder %v91, %v152
    %vm177 = vcmp.eq.s32.totalorder %v91, %v153
    %vm178 = vcmp.eq.s32.totalorder %v94, %v152
    %vm179 = vcmp.eq.s32.totalorder %v94, %v153
    %vm180 = vcmp.eq.s32.totalorder %v97, %v152
    %vm181 = vcmp.eq.s32.totalorder %v97, %v153
    %vm182 = vcmp.eq.s32.totalorder %v100, %v152
    %vm183 = vcmp.eq.s32.totalorder %v100, %v153
    %vm184 = vcmp.eq.s32.totalorder %v103, %v152
    %vm185 = vcmp.eq.s32.totalorder %v103, %v153
    %vm186 = vcmp.eq.s32.totalorder %v106, %v152
    %vm187 = vcmp.eq.s32.totalorder %v106, %v153
    %vm188 = vcmp.eq.s32.totalorder %v109, %v152
    %vm189 = vcmp.eq.s32.totalorder %v109, %v153
    %vm190 = vcmp.eq.s32.totalorder %v112, %v152
    %vm191 = vcmp.eq.s32.totalorder %v112, %v153
    %vm192 = vcmp.eq.s32.totalorder %v115, %v152
    %vm193 = vcmp.eq.s32.totalorder %v115, %v153
    %vm194 = vcmp.eq.s32.totalorder %v118, %v152
    %vm195 = vcmp.eq.s32.totalorder %v118, %v153
    %vm196 = vcmp.eq.s32.totalorder %v121, %v152
    %vm197 = vcmp.eq.s32.totalorder %v121, %v153
    %vm198 = vcmp.eq.s32.totalorder %v124, %v152
    %vm199 = vcmp.eq.s32.totalorder %v124, %v153
    %vm200 = vcmp.eq.s32.totalorder %v127, %v152
    %vm201 = vcmp.eq.s32.totalorder %v127, %v153
    %vm202 = vcmp.eq.s32.totalorder %v130, %v152
    %vm203 = vcmp.eq.s32.totalorder %v130, %v153
    %vm204 = vcmp.eq.s32.totalorder %v133, %v152
    %vm205 = vcmp.eq.s32.totalorder %v133, %v153
    %vm206 = vcmp.eq.s32.totalorder %v136, %v152
    %vm207 = vcmp.eq.s32.totalorder %v136, %v153
    %vm208 = vcmp.eq.s32.totalorder %v139, %v152
    %vm209 = vcmp.eq.s32.totalorder %v139, %v153
    %vm210 = vcmp.eq.s32.totalorder %v142, %v152
    %vm211 = vcmp.eq.s32.totalorder %v142, %v153
    %vm212 = vcmp.eq.s32.totalorder %v145, %v152
    %vm213 = vcmp.eq.s32.totalorder %v145, %v153
    %vm214 = vcmp.eq.s32.totalorder %v148, %v152
    %vm215 = vcmp.eq.s32.totalorder %v148, %v153
    %vm216 = vcmp.eq.s32.totalorder %v151, %v152
    %vm217 = vcmp.eq.s32.totalorder %v151, %v153
    %v218 = vsel %vm154, 1, 0
    %v219 = vsel %vm155, 1, 0
    %v220 = vsel %vm156, 1, 0
    %v221 = vsel %vm157, 1, 0
    %v222 = vsel %vm158, 1, 0
    %v223 = vsel %vm159, 1, 0
    %v224 = vsel %vm160, 1, 0
    %v225 = vsel %vm161, 1, 0
    %v226 = vsel %vm162, 1, 0
    %v227 = vsel %vm163, 1, 0
    %v228 = vsel %vm164, 1, 0
    %v229 = vsel %vm165, 1, 0
    %v230 = vsel %vm166, 1, 0
    %v231 = vsel %vm167, 1, 0
    %v232 = vsel %vm168, 1, 0
    %v233 = vsel %vm169, 1, 0
    %v234 = vsel %vm170, 1, 0
    %v235 = vsel %vm171, 1, 0
    %v236 = vsel %vm172, 1, 0
    %v237 = vsel %vm173, 1, 0
    %v238 = vsel %vm174, 1, 0
    %v239 = vsel %vm175, 1, 0
    %v240 = vsel %vm176, 1, 0
    %v241 = vsel %vm177, 1, 0
    %v242 = vsel %vm178, 1, 0
    %v243 = vsel %vm179, 1, 0
    %v244 = vsel %vm180, 1, 0
    %v245 = vsel %vm181, 1, 0
    %v246 = vsel %vm182, 1, 0
    %v247 = vsel %vm183, 1, 0
    %v248 = vsel %vm184, 1, 0
    %v249 = vsel %vm185, 1, 0
    %v250 = vsel %vm186, 1, 0
    %v251 = vsel %vm187, 1, 0
    %v252 = vsel %vm188, 1, 0
    %v253 = vsel %vm189, 1, 0
    %v254 = vsel %vm190, 1, 0
    %v255 = vsel %vm191, 1, 0
    %v256 = vsel %vm192, 1, 0
    %v257 = vsel %vm193, 1, 0
    %v258 = vsel %vm194, 1, 0
    %v259 = vsel %vm195, 1, 0
    %v260 = vsel %vm196, 1, 0
    %v261 = vsel %vm197, 1, 0
    %v262 = vsel %vm198, 1, 0
    %v263 = vsel %vm199, 1, 0
    %v264 = vsel %vm200, 1, 0
    %v265 = vsel %vm201, 1, 0
    %v266 = vsel %vm202, 1, 0
    %v267 = vsel %vm203, 1, 0
    %v268 = vsel %vm204, 1, 0
    %v269 = vsel %vm205, 1, 0
    %v270 = vsel %vm206, 1, 0
    %v271 = vsel %vm207, 1, 0
    %v272 = vsel %vm208, 1, 0
    %v273 = vsel %vm209, 1, 0
    %v274 = vsel %vm210, 1, 0
    %v275 = vsel %vm211, 1, 0
    %v276 = vsel %vm212, 1, 0
    %v277 = vsel %vm213, 1, 0
    %v278 = vsel %vm214, 1, 0
    %v279 = vsel %vm215, 1, 0
    %v280 = vsel %vm216, 1, 0
    %v281 = vsel %vm217, 1, 0
    %v282 = vcvt.s32.f32 %v218
    %v283 = vcvt.s32.f32 %v219
    %v284 = vcvt.s32.f32 %v220
    %v285 = vcvt.s32.f32 %v221
    %v286 = vcvt.s32.f32 %v222
    %v287 = vcvt.s32.f32 %v223
    %v288 = vcvt.s32.f32 %v224
    %v289 = vcvt.s32.f32 %v225
    %v290 = vcvt.s32.f32 %v226
    %v291 = vcvt.s32.f32 %v227
    %v292 = vcvt.s32.f32 %v228
    %v293 = vcvt.s32.f32 %v229
    %v294 = vcvt.s32.f32 %v230
    %v295 = vcvt.s32.f32 %v231
    %v296 = vcvt.s32.f32 %v232
    %v297 = vcvt.s32.f32 %v233
    %v298 = vcvt.s32.f32 %v234
    %v299 = vcvt.s32.f32 %v235
    %v300 = vcvt.s32.f32 %v236
    %v301 = vcvt.s32.f32 %v237
    %v302 = vcvt.s32.f32 %v238
    %v303 = vcvt.s32.f32 %v239
    %v304 = vcvt.s32.f32 %v240
    %v305 = vcvt.s32.f32 %v241
    %v306 = vcvt.s32.f32 %v242
    %v307 = vcvt.s32.f32 %v243
    %v308 = vcvt.s32.f32 %v244
    %v309 = vcvt.s32.f32 %v245
    %v310 = vcvt.s32.f32 %v246
    %v311 = vcvt.s32.f32 %v247
    %v312 = vcvt.s32.f32 %v248
    %v313 = vcvt.s32.f32 %v249
    %v314 = vcvt.s32.f32 %v250
    %v315 = vcvt.s32.f32 %v251
    %v316 = vcvt.s32.f32 %v252
    %v317 = vcvt.s32.f32 %v253
    %v318 = vcvt.s32.f32 %v254
    %v319 = vcvt.s32.f32 %v255
    %v320 = vcvt.s32.f32 %v256
    %v321 = vcvt.s32.f32 %v257
    %v322 = vcvt.s32.f32 %v258
    %v323 = vcvt.s32.f32 %v259
    %v324 = vcvt.s32.f32 %v260
    %v325 = vcvt.s32.f32 %v261
    %v326 = vcvt.s32.f32 %v262
    %v327 = vcvt.s32.f32 %v263
    %v328 = vcvt.s32.f32 %v264
    %v329 = vcvt.s32.f32 %v265
    %v330 = vcvt.s32.f32 %v266
    %v331 = vcvt.s32.f32 %v267
    %v332 = vcvt.s32.f32 %v268
    %v333 = vcvt.s32.f32 %v269
    %v334 = vcvt.s32.f32 %v270
    %v335 = vcvt.s32.f32 %v271
    %v336 = vcvt.s32.f32 %v272
    %v337 = vcvt.s32.f32 %v273
    %v338 = vcvt.s32.f32 %v274
    %v339 = vcvt.s32.f32 %v275
    %v340 = vcvt.s32.f32 %v276
    %v341 = vcvt.s32.f32 %v277
    %v342 = vcvt.s32.f32 %v278
    %v343 = vcvt.s32.f32 %v279
    %v344 = vcvt.s32.f32 %v280
    %v345 = vcvt.s32.f32 %v281
    %v346 = vpack.c.bf16 %v284, %v282
    %v347 = vpack.c.bf16 %v285, %v283
    %v348 = vpack.c.bf16 %v288, %v286
    %v349 = vpack.c.bf16 %v289, %v287
    %v350 = vpack.c.bf16 %v292, %v290
    %v351 = vpack.c.bf16 %v293, %v291
    %v352 = vpack.c.bf16 %v296, %v294
    %v353 = vpack.c.bf16 %v297, %v295
    %v354 = vpack.c.bf16 %v300, %v298
    %v355 = vpack.c.bf16 %v301, %v299
    %v356 = vpack.c.bf16 %v304, %v302
    %v357 = vpack.c.bf16 %v305, %v303
    %v358 = vpack.c.bf16 %v308, %v306
    %v359 = vpack.c.bf16 %v309, %v307
    %v360 = vpack.c.bf16 %v312, %v310
    %v361 = vpack.c.bf16 %v313, %v311
    %v362 = vpack.c.bf16 %v316, %v314
    %v363 = vpack.c.bf16 %v317, %v315
    %v364 = vpack.c.bf16 %v320, %v318
    %v365 = vpack.c.bf16 %v321, %v319
    %v366 = vpack.c.bf16 %v324, %v322
    %v367 = vpack.c.bf16 %v325, %v323
    %v368 = vpack.c.bf16 %v328, %v326
    %v369 = vpack.c.bf16 %v329, %v327
    %v370 = vpack.c.bf16 %v332, %v330
    %v371 = vpack.c.bf16 %v333, %v331
    %v372 = vpack.c.bf16 %v336, %v334
    %v373 = vpack.c.bf16 %v337, %v335
    %v374 = vpack.c.bf16 %v340, %v338
    %v375 = vpack.c.bf16 %v341, %v339
    %v376 = vpack.c.bf16 %v344, %v342
    %v377 = vpack.c.bf16 %v345, %v343
    %v378 = vld [vmem:[#allocation2] sm:$0xff]
    %v379 = vld [vmem:[#allocation2 + $0x8] sm:$0xff]
    %v380 = vld [vmem:[#allocation2 + $0x10] sm:$0xff]
    %v381 = vld [vmem:[#allocation2 + $0x18] sm:$0xff]
    %v382 = vld [vmem:[%s0] sm:$0xff]
    %v383 = vld [vmem:[%s0 + $0x8] sm:$0xff]
    %v386 = vunpack.c.l.b16 %v382
    %v387 = vunpack.c.h.b16 %v382
    %v388 = vunpack.c.l.b16 %v383
    %v389 = vunpack.c.h.b16 %v383
    %v390 = vpack.c.b16 %v388, %v386
    %v391 = vpack.c.b16 %v389, %v387
    %394 = vmatpush.bf16.msra.mxu0 %v360
    %395 = vmatpush.bf16.msra.mxu0 %v358
    %396 = vmatpush.bf16.msra.mxu0 %v356
    %397 = vmatpush.bf16.msra.mxu0 %v354
    %398 = vmatpush.bf16.msra.mxu0 %v352
    %399 = vmatpush.bf16.msra.mxu0 %v350
    %400 = vmatpush.bf16.msra.mxu0 %v348
    %401 = vmatpush.bf16.msra.mxu0 %v346
    %402 = vmatmul.bf16.gmra.mxu0 %v390
    %v403 = vpop.f32.mrf.mxu0
    %v404 = vadd.f32 0.0, %v403
    %v405 = vpop.f32.mrf.mxu0
    %v406 = vadd.f32 0.0, %v405
    %407 = vdwg.mxu0
    %408 = vmatpush.bf16.msra.mxu0 %v376
    %409 = vmatpush.bf16.msra.mxu0 %v374
    %410 = vmatpush.bf16.msra.mxu0 %v372
    %411 = vmatpush.bf16.msra.mxu0 %v370
    %412 = vmatpush.bf16.msra.mxu0 %v368
    %413 = vmatpush.bf16.msra.mxu0 %v366
    %414 = vmatpush.bf16.msra.mxu0 %v364
    %415 = vmatpush.bf16.msra.mxu0 %v362
    %416 = vmatmul.bf16.gmra.mxu0 %v391
    %v417 = vpop.f32.mrf.mxu0
    %v418 = vadd.f32 %v404, %v417
    %v419 = vpop.f32.mrf.mxu0
    %v420 = vadd.f32 %v406, %v419
    %421 = vdwg.mxu0
    %422 = vmatpush.bf16.msra.mxu0 %v361
    %423 = vmatpush.bf16.msra.mxu0 %v359
    %424 = vmatpush.bf16.msra.mxu0 %v357
    %425 = vmatpush.bf16.msra.mxu0 %v355
    %426 = vmatpush.bf16.msra.mxu0 %v353
    %427 = vmatpush.bf16.msra.mxu0 %v351
    %428 = vmatpush.bf16.msra.mxu0 %v349
    %429 = vmatpush.bf16.msra.mxu0 %v347
    %430 = vmatmul.bf16.gmra.mxu0 %v390
    %v431 = vpop.f32.mrf.mxu0
    %v432 = vadd.f32 0.0, %v431
    %v433 = vpop.f32.mrf.mxu0
    %v434 = vadd.f32 0.0, %v433
    %435 = vdwg.mxu0
    %436 = vmatpush.bf16.msra.mxu0 %v377
    %437 = vmatpush.bf16.msra.mxu0 %v375
    %438 = vmatpush.bf16.msra.mxu0 %v373
    %439 = vmatpush.bf16.msra.mxu0 %v371
    %440 = vmatpush.bf16.msra.mxu0 %v369
    %441 = vmatpush.bf16.msra.mxu0 %v367
    %442 = vmatpush.bf16.msra.mxu0 %v365
    %443 = vmatpush.bf16.msra.mxu0 %v363
    %444 = vmatmul.bf16.gmra.mxu0 %v391
    %v445 = vpop.f32.mrf.mxu0
    %v446 = vadd.f32 %v432, %v445
    %v447 = vpop.f32.mrf.mxu0
    %v448 = vadd.f32 %v434, %v447
    %449 = vdwg.mxu0
    %v450 = vadd.f32 %v378, %v418
    %v451 = vadd.f32 %v379, %v446
    %v452 = vadd.f32 %v380, %v420
    %v453 = vadd.f32 %v381, %v448
    %454 = vst [vmem:[#allocation2] sm:$0xff] %v450
    %455 = vst [vmem:[#allocation2 + $0x8] sm:$0xff] %v451
    %456 = vst [vmem:[#allocation2 + $0x10] sm:$0xff] %v452
    %457 = vst [vmem:[#allocation2 + $0x18] sm:$0xff] %v453
    // Predicated region
    $region18: #{tpu_custom_call.1} parent=1 // pred_check
      _
    $region19: #{tpu_custom_call.1} parent=1 // pred_check_branch
      %459 = sbr.rel (0) target = $region21
    $region20: #{tpu_custom_call.1} parent=1 // pred_region
      %461 = vsyncadd [#allocation3], 0
      %s462 = sshll.u32 [#allocation2], 4
      %s463 = int_to_ptr.vmem [resolvable:$true] %s462
      %s464 = sshll.u32 %s3, 4
      %s465 = int_to_ptr.hbm [resolvable:$true] %s464
      %470 = dma.vmem_to_hbm [thread:$0]  %s463, 512, %s465, [#allocation3], 256, 256, 16
    $region21: #{tpu_custom_call.1} parent=1 // pred_fallthru
      _
    // Predicated region
    $region22: #{tpu_custom_call.1} parent=1 // pred_check
      _
    $region23: #{tpu_custom_call.1} parent=1 // pred_check_branch
      %472 = sbr.rel (0) target = $region25
    $region24: #{tpu_custom_call.1} parent=1 // pred_region
      %474 = dma.done [#allocation3], 512
    $region25: #{tpu_custom_call.1} parent=1 // pred_fallthru
      _
    %475 = vsyncpa [#allocation3], 1

</llo_original>
